<compile_context>
chip_gen: v5e
topology: v5e:2x2
jax: 0.10.0
libtpu: 0.0.40
codegen_flags: <defaults>
</compile_context>

<pallas_src>
import functools

import numpy as np

import jax
import jax.numpy as jnp
from jax.experimental import pallas as pl
from jax.experimental.pallas import tpu as pltpu


def _mse_kernel(kt_ref, pred_ref, true_ref, mask_ref, out_ref, acc_ref, *,
                rows_total, tb, tc, rows_ragged):
    # kt_ref: SMEM kept-tile indices (only used by the index_maps; unused here).
    # pred_ref/true_ref: (TB, TC) tiles (native dtype); mask_ref: (1, TC) f32 {0,1}.
    # out_ref: (1, 128) f32 partial-sum slot for this row tile; acc_ref: (8, TC) f32.
    del kt_ref
    i = pl.program_id(0)          # row tile ("parallel")
    j = pl.program_id(1)          # kept channel tile (reduction axis, "arbitrary")

    @pl.when(j == 0)
    def _():
        acc_ref[...] = jnp.zeros_like(acc_ref)

    p = pred_ref[...].astype(jnp.float32)
    t = true_ref[...].astype(jnp.float32)
    d = p - t
    keep = mask_ref[...] != 0.0   # (1, TC) bool; zero-padded mask guards the C tail.

    def accumulate(sq):
        if tb % 8 == 0:
            # Layout-preserving split of the sublane-block dim -> pure VALU adds.
            acc_ref[...] += jnp.sum(sq.reshape(tb // 8, 8, tc), axis=0)
        else:
            # Tiny-B fallback (TB == B < 8): single sublane reduce per step.
            row_sums = jnp.sum(sq, axis=0, keepdims=True)            # (1, TC)
            acc_ref[pl.ds(0, 1), :] = acc_ref[pl.ds(0, 1), :] + row_sums

    if rows_ragged:
        last_i = pl.num_programs(0) - 1

        @pl.when(i != last_i)
        def _():
            accumulate(jnp.where(keep, d * d, 0.0))

        @pl.when(i == last_i)
        def _():
            row_ids = jax.lax.broadcasted_iota(jnp.int32, d.shape, 0) + i * tb
            valid = keep & (row_ids < rows_total)
            accumulate(jnp.where(valid, d * d, 0.0))
    else:
        accumulate(jnp.where(keep, d * d, 0.0))

    @pl.when(j == pl.num_programs(1) - 1)
    def _():
        # Single cross-lane/sublane reduction per row tile (not per grid step).
        total = jnp.sum(acc_ref[...])
        lane = jax.lax.broadcasted_iota(jnp.int32, (1, 128), 1)
        out_ref[...] = jnp.where(lane == 0, total, 0.0)


def _round_up(x, m):
    return (x + m - 1) // m * m


def _vmem_capacity_bytes():
    try:
        info = pltpu.get_tpu_info()
        cap = getattr(info, "vmem_capacity_bytes", None)
        if cap:
            return int(cap)
    except Exception:
        pass
    return 64 * 2**20  # conservative default (v7x per-TC VMEM); safe everywhere.


def masked_mse(pred, true, exclude_mask, *, tb=None, tc=None):
    """MSE over non-excluded channels. pred/true: (B, C), any float dtype."""
    assert pred.shape == true.shape and pred.ndim == 2
    B, C = pred.shape

    # Host-side (concrete) mask handling; exclude_mask is a module constant.
    keep_np = ~np.asarray(exclude_mask, dtype=bool)
    n_keep = int(keep_np.sum())
    if n_keep == 0:
        # PyTorch: mean over an empty selection is NaN.
        return jnp.array(jnp.nan, dtype=jnp.float32)

    cap = _vmem_capacity_bytes()
    budget = cap // 2                       # double-buffered input working-set budget
    io_itemsize = jnp.dtype(pred.dtype).itemsize + jnp.dtype(true.dtype).itemsize

    # Row tile: aim for >= 2 row tiles so the "parallel" row axis can be sharded
    # across TensorCores (megacore / v7x dual-TC); 8-aligned; capped at 512.
    if tb is not None:
        TB = tb
    elif B <= 8:
        TB = B                              # full extent (always legal)
    else:
        TB = min(512, _round_up(pl.cdiv(B, 2), 8))

    # Channel tile: largest of {1024, 2048, 4096} whose double-buffered working set
    # fits the per-chip VMEM budget (4096 on 128 MiB v5e/v6e, 2048 on 64 MiB v7x);
    # full extent when C is small.
    if tc is not None:
        TC = tc
    else:
        TC = 1024
        for cand in (2048, 4096):
            if 2 * TB * cand * io_itemsize + (8 << 20) <= budget:
                TC = cand
        if C <= TC:
            TC = C                          # full extent (always legal)

    Gi = pl.cdiv(B, TB)
    Gj_full = pl.cdiv(C, TC)
    C_pad = Gj_full * TC

    # Keep-mask as f32 {0,1}, zero-padded to the channel-tile boundary so the mask
    # select doubles as the ragged-C guard.
    mask_np = np.zeros((1, C_pad), dtype=np.float32)
    mask_np[0, :C] = keep_np.astype(np.float32)
    mask_f = jnp.asarray(mask_np)

    # Compact away channel tiles with no kept channels: their HBM bytes are never
    # DMA'd and the reduction grid shrinks to the kept-tile count.
    tile_has_keep = mask_np.reshape(Gj_full, TC).any(axis=1)
    kept_tiles_np = np.flatnonzero(tile_has_keep).astype(np.int32)
    n_kept_tiles = int(kept_tiles_np.size)
    kept_tiles = jnp.asarray(kept_tiles_np)

    rows_ragged = (Gi * TB) != B

    kernel = functools.partial(_mse_kernel, rows_total=B, tb=TB, tc=TC,
                               rows_ragged=rows_ragged)

    # 2 inputs x 2 pipeline buffers (both dtypes) + mask + accumulator + headroom,
    # clamped to 3/4 of the chip's physical VMEM (v7x is only 64 MiB).
    needed = 2 * TB * TC * io_itemsize + C_pad * 4 + 8 * TC * 4 + (8 << 20)
    vmem_limit = int(min(cap * 3 // 4, max(32 << 20, needed)))

    partials = pl.pallas_call(
        kernel,
        out_shape=jax.ShapeDtypeStruct((Gi, 128), jnp.float32),
        grid_spec=pltpu.PrefetchScalarGridSpec(
            num_scalar_prefetch=1,
            grid=(Gi, n_kept_tiles),
            in_specs=[
                pl.BlockSpec((TB, TC), lambda i, j, kt: (i, kt[j])),   # pred tile
                pl.BlockSpec((TB, TC), lambda i, j, kt: (i, kt[j])),   # true tile
                pl.BlockSpec((1, TC), lambda i, j, kt: (0, kt[j])),    # keep-mask tile
            ],
            out_specs=pl.BlockSpec((1, 128), lambda i, j, kt: (i, 0)),
            scratch_shapes=[pltpu.VMEM((8, TC), jnp.float32)],
        ),
        compiler_params=pltpu.CompilerParams(
            dimension_semantics=("parallel", "arbitrary"),
            vmem_limit_bytes=vmem_limit,
        ),
    )(kept_tiles, pred, true, mask_f)

    # Tiny final reduction + single scale in plain JAX.
    return jnp.sum(partials) * jnp.float32(1.0 / (B * n_keep))


if __name__ == "__main__":
    key = jax.random.PRNGKey(0)

    # Small shapes consistent with the module: (batch, channels).
    B, C = 4, 32
    k1, k2 = jax.random.split(key)
    pred = jax.random.normal(k1, (B, C), dtype=jnp.float32)
    true = jax.random.normal(k2, (B, C), dtype=jnp.float32)
    exclude_mask = (jnp.arange(C) % 3) == 0   # exclude every 3rd channel

    loss = masked_mse(pred, true, exclude_mask)
    jax.block_until_ready(loss)

    keep = ~exclude_mask
    ref = jnp.mean(jnp.square(pred[:, keep] - true[:, keep]))
    assert jnp.allclose(loss, ref, rtol=1e-6, atol=1e-6), (loss, ref)

    # Check 2: tiled / ragged-edge path (B and C not multiples of the tile sizes).
    B2, C2 = 10, 200
    k3, k4 = jax.random.split(k1)
    p2 = jax.random.normal(k3, (B2, C2), dtype=jnp.float32)
    t2 = jax.random.normal(k4, (B2, C2), dtype=jnp.float32)
    ex2 = (jnp.arange(C2) % 5) == 0
    loss2 = masked_mse(p2, t2, ex2, tb=8, tc=128)
    jax.block_until_ready(loss2)
    keep2 = ~ex2
    ref2 = jnp.mean(jnp.square(p2[:, keep2] - t2[:, keep2]))
    assert jnp.allclose(loss2, ref2, rtol=1e-5, atol=1e-6), (loss2, ref2)

    # Check 3: a fully-excluded channel tile (exercises the kept-tile compaction).
    B3, C3 = 16, 384
    k5, k6 = jax.random.split(k3)
    p3 = jax.random.normal(k5, (B3, C3), dtype=jnp.float32)
    t3 = jax.random.normal(k6, (B3, C3), dtype=jnp.float32)
    ex3_np = np.zeros((C3,), dtype=bool)
    ex3_np[128:256] = True                    # whole middle 128-wide tile excluded
    ex3_np[::7] = True                        # plus scattered exclusions elsewhere
    ex3 = jnp.asarray(ex3_np)
    loss3 = masked_mse(p3, t3, ex3, tb=8, tc=128)
    jax.block_until_ready(loss3)
    keep3 = ~ex3
    ref3 = jnp.mean(jnp.square(p3[:, keep3] - t3[:, keep3]))
    assert jnp.allclose(loss3, ref3, rtol=1e-5, atol=1e-6), (loss3, ref3)

    print("KERNEL_OK")
</pallas_src>

<mosaic_0001>
module attributes {stable_mosaic.version = 11 : i64} {
  func.func @_mse_kernel(%arg0: i32, %arg1: i32, %arg2: memref<1xi32, #tpu.memory_space<smem>>, %arg3: memref<4x32xf32, #tpu.memory_space<vmem>>, %arg4: memref<4x32xf32, #tpu.memory_space<vmem>>, %arg5: memref<1x32xf32, #tpu.memory_space<vmem>>, %arg6: memref<1x128xf32, #tpu.memory_space<vmem>>, %arg7: memref<8x32xf32, #tpu.memory_space<vmem>>) attributes {dimension_semantics = [#tpu.dimension_semantics<parallel>, #tpu.dimension_semantics<arbitrary>], iteration_bounds = array<i64: 1, 1>, scalar_prefetch = 1 : i64, scratch_operands = 1 : i64, tpu.core_type = #tpu.core_type<tc>, window_params = [{transform_indices = @transform_0, window_bounds = array<i64: 4, 32>}, {transform_indices = @transform_1, window_bounds = array<i64: 4, 32>}, {transform_indices = @transform_2, window_bounds = array<i64: 1, 32>}, {transform_indices = @transform_3, window_bounds = array<i64: 1, 128>}]} {
    %c0_i32 = arith.constant 0 : i32
    %0 = arith.cmpi eq, %arg1, %c0_i32 : i32
    %1 = arith.extui %0 : i1 to i32
    %c0_i32_0 = arith.constant 0 : i32
    %2 = arith.cmpi ne, %1, %c0_i32_0 : i32
    scf.if %2 {
      %cst_14 = arith.constant 0.000000e+00 : f32
      %22 = vector.broadcast %cst_14 : f32 to vector<8x32xf32>
      %c0_15 = arith.constant 0 : index
      %c0_16 = arith.constant 0 : index
      %23 = vector.load %arg7[%c0_15, %c0_16] : memref<8x32xf32, #tpu.memory_space<vmem>>, vector<8x32xf32>
      tpu.vector_store %arg7[%c0_15, %c0_16], %22 {strides = array<i32>} : memref<8x32xf32, #tpu.memory_space<vmem>>, vector<8x32xf32>,
    } else {
    }
    %c0 = arith.constant 0 : index
    %c0_1 = arith.constant 0 : index
    %3 = vector.load %arg3[%c0, %c0_1] : memref<4x32xf32, #tpu.memory_space<vmem>>, vector<4x32xf32>
    %c0_2 = arith.constant 0 : index
    %c0_3 = arith.constant 0 : index
    %4 = vector.load %arg4[%c0_2, %c0_3] : memref<4x32xf32, #tpu.memory_space<vmem>>, vector<4x32xf32>
    %5 = arith.subf %3, %4 : vector<4x32xf32>
    %c0_4 = arith.constant 0 : index
    %c0_5 = arith.constant 0 : index
    %6 = vector.load %arg5[%c0_4, %c0_5] : memref<1x32xf32, #tpu.memory_space<vmem>>, vector<1x32xf32>
    %cst = arith.constant 0.000000e+00 : f32
    %7 = vector.broadcast %cst : f32 to vector<1x32xf32>
    %8 = arith.cmpf one, %6, %7 : vector<1x32xf32>
    %9 = arith.mulf %5, %5 : vector<4x32xf32>
    %cst_6 = arith.constant 0.000000e+00 : f32
    %10 = vector.shape_cast %8 : vector<1x32xi1> to vector<1x32xi1>
    %11 = vector.broadcast %10 : vector<1x32xi1> to vector<4x32xi1>
    %12 = vector.broadcast %cst_6 : f32 to vector<4x32xf32>
    %13 = arith.select %11, %9, %12 : vector<4x32xi1>, vector<4x32xf32>
    %cst_7 = arith.constant dense<0.000000e+00> : vector<32xf32>
    %14 = vector.multi_reduction <add>, %13, %cst_7 [0] : vector<4x32xf32> to vector<32xf32>
    %15 = vector.shape_cast %14 : vector<32xf32> to vector<1x32xf32>
    %c0_8 = arith.constant 0 : index
    %c0_9 = arith.constant 0 : index
    %16 = vector.load %arg7[%c0_8, %c0_9] : memref<8x32xf32, #tpu.memory_space<vmem>>, vector<1x32xf32>
    %17 = arith.addf %16, %15 : vector<1x32xf32>
    %c0_10 = arith.constant 0 : index
    %c0_11 = arith.constant 0 : index
    %18 = vector.load %arg7[%c0_10, %c0_11] : memref<8x32xf32, #tpu.memory_space<vmem>>, vector<1x32xf32>
    tpu.vector_store %arg7[%c0_10, %c0_11], %17 {strides = array<i32>} : memref<8x32xf32, #tpu.memory_space<vmem>>, vector<1x32xf32>,
    %c0_i32_12 = arith.constant 0 : i32
    %19 = arith.cmpi eq, %arg1, %c0_i32_12 : i32
    %20 = arith.extui %19 : i1 to i32
    %c0_i32_13 = arith.constant 0 : i32
    %21 = arith.cmpi ne, %20, %c0_i32_13 : i32
    scf.if %21 {
      %c0_14 = arith.constant 0 : index
      %c0_15 = arith.constant 0 : index
      %22 = vector.load %arg7[%c0_14, %c0_15] : memref<8x32xf32, #tpu.memory_space<vmem>>, vector<8x32xf32>
      %23 = vector.shape_cast %22 : vector<8x32xf32> to vector<1x8x32xf32>
      %cst_16 = arith.constant dense<0.000000e+00> : vector<1xf32>
      %24 = vector.multi_reduction <add>, %23, %cst_16 [1, 2] : vector<1x8x32xf32> to vector<1xf32>
      %25 = vector.shape_cast %24 : vector<1xf32> to vector<1x1x1xf32>
      %26 = vector.extract %25[0, 0, 0] : f32 from vector<1x1x1xf32>
      %27 = tpu.iota {dimensions = array<i32: 1>} : vector<1x128xi32>
      %c0_i32_17 = arith.constant 0 : i32
      %28 = vector.broadcast %c0_i32_17 : i32 to vector<1x128xi32>
      %29 = arith.cmpi eq, %27, %28 : vector<1x128xi32>
      %cst_18 = arith.constant 0.000000e+00 : f32
      %30 = vector.broadcast %26 : f32 to vector<1x128xf32>
      %31 = vector.broadcast %cst_18 : f32 to vector<1x128xf32>
      %32 = arith.select %29, %30, %31 : vector<1x128xi1>, vector<1x128xf32>
      %c0_19 = arith.constant 0 : index
      %c0_20 = arith.constant 0 : index
      %33 = vector.load %arg6[%c0_19, %c0_20] : memref<1x128xf32, #tpu.memory_space<vmem>>, vector<1x128xf32>
      tpu.vector_store %arg6[%c0_19, %c0_20], %32 {strides = array<i32>} : memref<1x128xf32, #tpu.memory_space<vmem>>, vector<1x128xf32>,
    } else {
    }
    return
  }
  func.func @transform_0(%arg0: i32, %arg1: i32, %arg2: memref<1xi32, #tpu.memory_space<smem>>) -> (i32, i32) {
    %0 = arith.index_cast %arg1 : i32 to index
    %1 = memref.load %arg2[%0] : memref<1xi32, #tpu.memory_space<smem>>
    %c0_i32 = arith.constant 0 : i32
    return %arg0, %1 : i32, i32
  }
  func.func @transform_1(%arg0: i32, %arg1: i32, %arg2: memref<1xi32, #tpu.memory_space<smem>>) -> (i32, i32) {
    %0 = arith.index_cast %arg1 : i32 to index
    %1 = memref.load %arg2[%0] : memref<1xi32, #tpu.memory_space<smem>>
    %c0_i32 = arith.constant 0 : i32
    return %arg0, %1 : i32, i32
  }
  func.func @transform_2(%arg0: i32, %arg1: i32, %arg2: memref<1xi32, #tpu.memory_space<smem>>) -> (i32, i32) {
    %0 = arith.index_cast %arg1 : i32 to index
    %1 = memref.load %arg2[%0] : memref<1xi32, #tpu.memory_space<smem>>
    %c0_i32 = arith.constant 0 : i32
    %c0_i32_0 = arith.constant 0 : i32
    return %c0_i32, %1 : i32, i32
  }
  func.func @transform_3(%arg0: i32, %arg1: i32, %arg2: memref<1xi32, #tpu.memory_space<smem>>) -> (i32, i32) {
    %c0_i32 = arith.constant 0 : i32
    %c0_i32_0 = arith.constant 0 : i32
    return %arg0, %c0_i32 : i32, i32
  }
}

</mosaic_0001>

<llo_original>
// kernel: tpu_custom_call.1
$region0: #{tpu_custom_call.1}
  #allocation0 [shape = 'u32[]', space=smem, size = 0x4, offset = 0x4, fixed_abs, tag = 'smem constant byte address 0x4 - core index']
  #allocation1 [shape = 'u32[72,128]{1,0:T(1,128)}', space=vmem, size = 0x9000, scoped, tag = 'internal scratch']
  #allocation2 [shape = 'f32[8,32]{1,0:T(8,128)}', space=vmem, size = 0x1000, scoped, tag = 'scratch operand']
  #allocation3 [shape = 's32[1]{0}', space=sflag, size = 0x4, scoped, tag = 'scoped memory for tpu_custom_call.1']
  #allocation4 [shape = 's32[1]{0:T(128)S(6)}', space=smem, size = 0x200, scoped, tag = 'prefetched SMEM operand 0']
  %s0 = inlined_call_operand.<no memory space> [shape: s32[1], index: 0, kind: input, shape index: {}]
  %s1 = inlined_call_operand.hbm [shape: f32[4,32], index: 1, kind: input, shape index: {}]
  %s2 = inlined_call_operand.hbm [shape: f32[4,32], index: 2, kind: input, shape index: {}]
  %s3 = inlined_call_operand.vmem [shape: f32[1,32], index: 3, kind: input, shape index: {}]
  %s4 = inlined_call_operand.hbm [shape: f32[1,128], index: 4, kind: output, shape index: {}]
  %s5 = sld [smem:[#allocation0]]
  $region38: #{tpu_custom_call.1} parent=0
    _
  %s7 = ssub.s32 1, %s5
  %s8 = scalar_select 0, %s7, %s5
  %9 = sst [smem:[#allocation4]] %s0
  $region1: #{tpu_custom_call.1} parent=0
    #allocation5 [shape = 'u8[2048]{0}', space=vmem, size = 0x800, scoped, tag = 'input window, operand 1, single buffered']
    #allocation6 [shape = 's32[1]{0}', space=sflag, size = 0x4, scoped, tag = 'scoped memory for tpu_custom_call.1']
    #allocation7 [shape = 's32[1]{0}', space=sflag, size = 0x4, scoped, tag = 'scoped memory for tpu_custom_call.1']
    #allocation8 [shape = 'u8[2048]{0}', space=vmem, size = 0x800, scoped, tag = 'input window, operand 2, single buffered']
    #allocation9 [shape = 's32[1]{0}', space=sflag, size = 0x4, scoped, tag = 'scoped memory for tpu_custom_call.1']
    #allocation10 [shape = 'u8[512]{0}', space=vmem, size = 0x400, scoped, tag = 'output window, operand 0, single buffered']
    %10 = vsyncpa [#allocation6], 0
    %11 = vsyncpa [#allocation9], 0
    %12 = vsyncpa [#allocation7], 0
    // Predicated region
    $region2: #{tpu_custom_call.1} parent=1 // pred_check
      _
    $region3: #{tpu_custom_call.1} parent=1 // pred_check_branch
      %14 = sbr.rel (0) target = $region5
    $region4: #{tpu_custom_call.1} parent=1 // pred_region
      %s15 = sld [smem:[#allocation4]]
      %17 = vsyncadd [#allocation6], 0
      %s18 = smul.addr %s15, 4
      %s19 = scalar_lea.hbm %s1, %s18
      %s21 = sshll.u32 %s19, 4
      %s22 = int_to_ptr.hbm [resolvable:$true] %s21
      %s23 = sshll.u32 [#allocation5], 4
      %s24 = int_to_ptr.vmem [resolvable:$true] %s23
      %26 = dma.hbm_to_vmem [thread:$0]  %s22, 64, %s24, [#allocation6]
    $region5: #{tpu_custom_call.1} parent=1 // pred_fallthru
      _
    // Predicated region
    $region6: #{tpu_custom_call.1} parent=1 // pred_check
      _
    $region7: #{tpu_custom_call.1} parent=1 // pred_check_branch
      %28 = sbr.rel (0) target = $region9
    $region8: #{tpu_custom_call.1} parent=1 // pred_region
      %s29 = sld [smem:[#allocation4]]
      %31 = vsyncadd [#allocation9], 0
      %s32 = smul.addr %s29, 4
      %s33 = scalar_lea.hbm %s2, %s32
      %s35 = sshll.u32 %s33, 4
      %s36 = int_to_ptr.hbm [resolvable:$true] %s35
      %s37 = sshll.u32 [#allocation8], 4
      %s38 = int_to_ptr.vmem [resolvable:$true] %s37
      %40 = dma.hbm_to_vmem [thread:$0]  %s36, 64, %s38, [#allocation9]
    $region9: #{tpu_custom_call.1} parent=1 // pred_fallthru
      _
    // Predicated region
    $region10: #{tpu_custom_call.1} parent=1 // pred_check
      _
    $region11: #{tpu_custom_call.1} parent=1 // pred_check_branch
      %42 = sbr.rel (0) target = $region13
    $region12: #{tpu_custom_call.1} parent=1 // pred_region
      %s43 = sld [smem:[#allocation4]]
      %p44 = scmp.lt.s32.totalorder %s43, 0
      %s45 = scalar_select %p44, %s43, 0
      %s46 = scalar_lea.vmem %s3, %s45
      %s47 = sld [smem:[#allocation4]]
    $region13: #{tpu_custom_call.1} parent=1 // pred_fallthru
      _
    // Predicated region
    $region14: #{tpu_custom_call.1} parent=1 // pred_check
      _
    $region15: #{tpu_custom_call.1} parent=1 // pred_check_branch
      %49 = sbr.rel (0) target = $region17
    $region16: #{tpu_custom_call.1} parent=1 // pred_region
      %51 = dma.done [#allocation6], 64
    $region17: #{tpu_custom_call.1} parent=1 // pred_fallthru
      _
    // Predicated region
    $region18: #{tpu_custom_call.1} parent=1 // pred_check
      _
    $region19: #{tpu_custom_call.1} parent=1 // pred_check_branch
      %53 = sbr.rel (0) target = $region21
    $region20: #{tpu_custom_call.1} parent=1 // pred_region
      %55 = dma.done [#allocation9], 64
    $region21: #{tpu_custom_call.1} parent=1 // pred_fallthru
      _
    %s56 = sld [smem:[#allocation4]]
    %p57 = scmp.lt.s32.totalorder %s56, 0
    %s58 = scalar_select %p57, %s56, 0
    %s59 = scalar_lea.vmem %s3, %s58
    %s60 = sld [smem:[#allocation4]]
    %s61 = sld [smem:[#allocation4]]
    %s62 = sld [smem:[#allocation4]]
    %p63 = scmp.lt.s32.totalorder %s62, 0
    %s64 = scalar_select %p63, %s62, 0
    %s65 = scalar_lea.vmem %s3, %s64
    %s66 = sld [smem:[#allocation4]]
    %p67 = scmp.eq.s32.totalorder 0, 0
    // Predicated region
    $region22: #{tpu_custom_call.1} parent=1 // pred_check
      %p68 = pneg %p67
    $region23: #{tpu_custom_call.1} parent=1 // pred_check_branch
      %70 = sbr.rel (%p68) target = $region25
    $region24: #{tpu_custom_call.1} parent=1 // pred_region
      %vm71 = vcmask 261120
      %72 = vst.msk [vmem:[#allocation2] sm:$0xff] %vm71, 0.0
    $region25: #{tpu_custom_call.1} parent=1 // pred_fallthru
      _
    %v73 = vld [vmem:[#allocation5] sm:$0xf]
    %v74 = vld [vmem:[#allocation8] sm:$0xf]
    %v75 = vsub.f32 %v73, %v74
    %v76 = vld [vmem:[%s65] sm:$0x1]
    %vm77 = vcmp.ne.f32.partialorder %v76, 0.0
    %v78 = vmul.f32 %v75, %v75
    %v79 = vsel %vm77, 1, 0
    %v80 = vperm.slane %v79, 0
    %vm81 = vcmp.eq.s32.totalorder %v80, 1
    %v82 = vsel %vm81, %v78, 0.0
    %vm83 = vcmask 257024
    %v84 = vsel %vm83, %v82, 0.0
    %v85 = vrot.slane %v84, 4
    %v86 = vadd.f32 %v84, %v85
    %v87 = vrot.slane %v86, 2
    %v88 = vadd.f32 %v86, %v87
    %v89 = vrot.slane %v88, 1
    %v90 = vadd.f32 %v88, %v89
    %v91 = vld [vmem:[#allocation2] sm:$0x1]
    %v92 = vadd.f32 %v91, %v90
    %vm93 = vcmask 253952
    %94 = vst.msk [vmem:[#allocation2] sm:$0x1] %vm93, %v92
    // Predicated region
    $region26: #{tpu_custom_call.1} parent=1 // pred_check
      %p95 = pneg %p67
    $region27: #{tpu_custom_call.1} parent=1 // pred_check_branch
      %97 = sbr.rel (%p95) target = $region29
    $region28: #{tpu_custom_call.1} parent=1 // pred_region
      %v98 = vld [vmem:[#allocation2] sm:$0xff]
      %vm99 = vcmask 261120
      %v100 = vsel %vm99, %v98, 0.0
      %101 = vadd.xlane.f32.xlu0 %v100
      %v102 = vpop.xlane.xlu0 %101
      %v103 = vrot.slane %v102, 4
      %v104 = vadd.f32 %v102, %v103
      %v105 = vrot.slane %v104, 2
      %v106 = vadd.f32 %v104, %v105
      %v107 = vrot.slane %v106, 1
      %v108 = vadd.f32 %v106, %v107
      %s109 = vtos %v108
      %v110 = vlaneseq
      %v111 = vand.u32 %v110, 127
      %vm112 = vcmp.eq.s32.totalorder %v111, 0
      %v113 = vstv %s109
      %v114 = vsel %vm112, %v113, 0.0
      %115 = vst [vmem:[#allocation10] sm:$0x1] %v114
    $region29: #{tpu_custom_call.1} parent=1 // pred_fallthru
      _
    // Predicated region
    $region30: #{tpu_custom_call.1} parent=1 // pred_check
      _
    $region31: #{tpu_custom_call.1} parent=1 // pred_check_branch
      %117 = sbr.rel (0) target = $region33
    $region32: #{tpu_custom_call.1} parent=1 // pred_region
      %119 = vsyncadd [#allocation7], 0
      %s121 = sshll.u32 [#allocation10], 4
      %s122 = int_to_ptr.vmem [resolvable:$true] %s121
      %s123 = sshll.u32 %s4, 4
      %s124 = int_to_ptr.hbm [resolvable:$true] %s123
      %126 = dma.vmem_to_hbm [thread:$0]  %s122, 16, %s124, [#allocation7]
    $region33: #{tpu_custom_call.1} parent=1 // pred_fallthru
      _
    // Predicated region
    $region34: #{tpu_custom_call.1} parent=1 // pred_check
      _
    $region35: #{tpu_custom_call.1} parent=1 // pred_check_branch
      %128 = sbr.rel (0) target = $region37
    $region36: #{tpu_custom_call.1} parent=1 // pred_region
      %130 = dma.done [#allocation7], 16
    $region37: #{tpu_custom_call.1} parent=1 // pred_fallthru
      _
    %131 = vsyncpa [#allocation6], 1
    %132 = vsyncpa [#allocation9], 1
    %133 = vsyncpa [#allocation7], 1

</llo_original>
